<compile_context>
chip_gen: v7x
topology: tpu7x:2x2x1
jax: 0.10.0
libtpu: 0.0.40
codegen_flags: <defaults>
</compile_context>

<pallas_src>
import jax
import jax.numpy as jnp
from jax import lax
from jax.experimental import pallas as pl
from jax.experimental.pallas import tpu as pltpu

MXU_DTYPE = jnp.bfloat16   # bf16 operands, f32 accumulation (v6e/v7x MXU-native)
NPAD = 128                 # lane-group width of each fused-matmul output half [branches | shortcut]
KPAD = 256                 # padded contraction dim (49*Cin = 196 -> 256)


def _sigmoid_approx(v):
    # EUP exp + EUP approximate reciprocal -> frees VPU divide slots on the big (HW, 128) tensors.
    return pl.reciprocal(1.0 + jnp.exp(-v), approx=True)


def multiscale_kernel(p_ref, w_ref, b_ref, wfc1t_ref, wfc2_ref, o_ref):
    # p_ref:     (1, HW, KPAD)     bf16 im2col patches (K zero-padded 196 -> 256)
    # w_ref:     (KPAD, 2*NPAD)    bf16 fused weights: lanes [0:Cout]   = folded 7x7 branch conv,
    #                              lanes [NPAD:NPAD+Cout] = folded 1x1 shortcut, rest zero
    # b_ref:     (1, 2*NPAD)       f32 fused bias, same lane layout
    # wfc1t_ref: (Cr, NPAD)        f32 SE fc1, transposed + zero-padded to 128 lanes
    # wfc2_ref:  (Cr, NPAD)        f32 SE fc2, zero-padded to 128 lanes
    # o_ref:     (1, HW, NPAD)     f32 lane-dense output (valid lanes [0:Cout], rest exactly 0)
    lhs = p_ref[0]                                                     # (HW, KPAD)

    # Single fused MXU matmul: all 4 branches + shortcut, f32 accumulate.
    r = jnp.dot(lhs, w_ref[...], preferred_element_type=jnp.float32) + b_ref[...]
    y = r[:, :NPAD]          # branch concat (BN folded), pre-activation; pad lanes are 0
    sc = r[:, NPAD:]         # shortcut 1x1 conv + BN (folded); pad lanes are 0

    y = y * _sigmoid_approx(y)                                         # per-branch SiLU

    # Squeeze-and-Excitation.  Global average pool over the image, then the two tiny FC layers as
    # VPU broadcast-multiply + XLU reductions (M=1 matmuls stay off the MXU critical path).
    pooled = jnp.mean(y, axis=0, keepdims=True)                        # (1, NPAD); pad lanes 0
    h1 = jnp.maximum(jnp.sum(wfc1t_ref[...] * pooled, axis=1, keepdims=True), 0.0)   # (Cr, 1)
    gate_pre = jnp.sum(h1 * wfc2_ref[...], axis=0, keepdims=True)      # (1, NPAD)
    gate = 1.0 / (1.0 + jnp.exp(-gate_pre))   # exact reciprocal: gate scales the whole feature map

    z = y * gate + sc
    o_ref[0] = z * _sigmoid_approx(z)                                  # final SiLU


def im2col_7x7(x_nhwc, dtype, kpad):
    """(B,H,W,Cin) -> (B, H*W, kpad) bf16 patches for a 'same'-padded 7x7 conv (tap order dh*7+dw)."""
    B, H, W, Cin = x_nhwc.shape
    x = x_nhwc.astype(dtype)                 # cast BEFORE im2col: pad/slice/concat all run in bf16
    xp = jnp.pad(x, ((0, 0), (3, 3), (3, 3), (0, 0)))
    cols = [xp[:, dh:dh + H, dw:dw + W, :] for dh in range(7) for dw in range(7)]
    patches = jnp.concatenate(cols, axis=-1).reshape(B, H * W, 49 * Cin)
    if kpad > 49 * Cin:                      # zero-pad contraction dim to a 128-multiple
        patches = jnp.pad(patches, ((0, 0), (0, 0), (0, kpad - 49 * Cin)))
    return patches


def multiscale_block_pallas(x_nhwc, params):
    B, H, W, Cin = x_nhwc.shape
    Cout = params["cout"]
    Cr = params["wfc1t"].shape[0]
    HW = H * W

    patches = im2col_7x7(x_nhwc, params["w_big"].dtype, KPAD)          # (B, HW, KPAD) bf16

    out_pad = pl.pallas_call(
        multiscale_kernel,
        out_shape=jax.ShapeDtypeStruct((B, HW, NPAD), jnp.float32),
        grid_spec=pltpu.PrefetchScalarGridSpec(
            num_scalar_prefetch=0,
            grid=(B,),
            in_specs=[
                pl.BlockSpec((1, HW, KPAD), lambda b: (b, 0, 0)),
                pl.BlockSpec((KPAD, 2 * NPAD), lambda b: (0, 0)),
                pl.BlockSpec((1, 2 * NPAD), lambda b: (0, 0)),
                pl.BlockSpec((Cr, NPAD), lambda b: (0, 0)),
                pl.BlockSpec((Cr, NPAD), lambda b: (0, 0)),
            ],
            out_specs=pl.BlockSpec((1, HW, NPAD), lambda b: (b, 0, 0)),
        ),
        compiler_params=pltpu.CompilerParams(
            dimension_semantics=("parallel",),        # batch steps independent -> megacore on v7x
            vmem_limit_bytes=32 * 1024 * 1024,
        ),
    )(patches, params["w_big"], params["b_big"], params["wfc1t"], params["wfc2"])

    return out_pad[:, :, :Cout].reshape(B, H, W, Cout)


# ---------------- deterministic parameter init & BN folding (plain JAX glue) ----------------
def init_raw_params(key, Cin, Cout):
    mid = Cout // 4
    Cr = Cout // 16
    keys = jax.random.split(key, 32)
    ki = iter(keys)
    branches = []
    for K in (1, 3, 5, 7):
        branches.append(dict(
            K=K,
            w=jax.random.normal(next(ki), (K, K, Cin, mid), jnp.float32) * 0.1,   # HWIO
            b=jax.random.normal(next(ki), (mid,), jnp.float32) * 0.1,
            gamma=1.0 + 0.1 * jax.random.normal(next(ki), (mid,), jnp.float32),
            beta=0.1 * jax.random.normal(next(ki), (mid,), jnp.float32),
            mean=0.1 * jax.random.normal(next(ki), (mid,), jnp.float32),
            var=0.5 + 0.1 * jnp.abs(jax.random.normal(next(ki), (mid,), jnp.float32)),
        ))
    sc = dict(
        w=jax.random.normal(next(ki), (1, 1, Cin, Cout), jnp.float32) * 0.1,
        b=jax.random.normal(next(ki), (Cout,), jnp.float32) * 0.1,
        gamma=1.0 + 0.1 * jax.random.normal(next(ki), (Cout,), jnp.float32),
        beta=0.1 * jax.random.normal(next(ki), (Cout,), jnp.float32),
        mean=0.1 * jax.random.normal(next(ki), (Cout,), jnp.float32),
        var=0.5 + 0.1 * jnp.abs(jax.random.normal(next(ki), (Cout,), jnp.float32)),
    )
    wfc1 = jax.random.normal(next(ki), (Cout, Cr), jnp.float32) * 0.2
    wfc2 = jax.random.normal(next(ki), (Cr, Cout), jnp.float32) * 0.2
    return dict(branches=branches, sc=sc, wfc1=wfc1, wfc2=wfc2)


def fold_params(raw, Cin, Cout, eps=1e-5, mxu_dtype=MXU_DTYPE):
    """Fold eval-mode BN into conv weights; build lane-dense fused matmul operands.

    w_big: (KPAD, 2*NPAD) bf16.  Rows [0:49*Cin] are tap rows (index (dh*7+dw)*Cin + c), rest zero.
    Columns: [0:Cout] = folded branch conv, [NPAD:NPAD+Cout] = folded 1x1 shortcut, rest zero.
    """
    mid = Cout // 4
    wconv = jnp.zeros((7, 7, Cin, Cout), jnp.float32)
    bconv = jnp.zeros((Cout,), jnp.float32)
    for i, br in enumerate(raw["branches"]):
        K = br["K"]
        scale = br["gamma"] / jnp.sqrt(br["var"] + eps)                 # (mid,)
        wf = br["w"] * scale                                            # fold BN into conv
        bf = (br["b"] - br["mean"]) * scale + br["beta"]
        off = (7 - K) // 2
        wconv = wconv.at[off:off + K, off:off + K, :, i * mid:(i + 1) * mid].set(wf)
        bconv = bconv.at[i * mid:(i + 1) * mid].set(bf)

    sc = raw["sc"]
    s_scale = sc["gamma"] / jnp.sqrt(sc["var"] + eps)
    wsc = sc["w"][0, 0] * s_scale                                       # (Cin, Cout)
    bsc = (sc["b"] - sc["mean"]) * s_scale + sc["beta"]

    K2C = 49 * Cin
    w_conv_flat = wconv.reshape(K2C, Cout)
    center = (3 * 7 + 3) * Cin                                          # centre tap (dh=3, dw=3)

    w_big = jnp.zeros((KPAD, 2 * NPAD), jnp.float32)
    w_big = w_big.at[:K2C, :Cout].set(w_conv_flat)
    w_big = w_big.at[center:center + Cin, NPAD:NPAD + Cout].set(wsc)
    w_big = w_big.astype(mxu_dtype)

    b_big = jnp.zeros((1, 2 * NPAD), jnp.float32)
    b_big = b_big.at[0, :Cout].set(bconv)
    b_big = b_big.at[0, NPAD:NPAD + Cout].set(bsc)

    Cr = raw["wfc1"].shape[1]
    wfc1t = jnp.zeros((Cr, NPAD), jnp.float32).at[:, :Cout].set(raw["wfc1"].T)   # (Cr, 128)
    wfc2p = jnp.zeros((Cr, NPAD), jnp.float32).at[:, :Cout].set(raw["wfc2"])     # (Cr, 128)

    return dict(w_big=w_big, b_big=b_big, wfc1t=wfc1t, wfc2=wfc2p, cout=Cout)


# ---------------- pure-JAX reference (un-folded, matches the PyTorch module) ----------------
def reference(x_nhwc, raw, eps=1e-5):
    def silu(v):
        return v * jax.nn.sigmoid(v)
    hp = lax.Precision.HIGHEST
    ys = []
    for br in raw["branches"]:
        K = br["K"]
        pad = (K - 1) // 2
        y = lax.conv_general_dilated(x_nhwc, br["w"], (1, 1),
                                     [(pad, pad), (pad, pad)],
                                     dimension_numbers=('NHWC', 'HWIO', 'NHWC'),
                                     precision=hp)
        y = y + br["b"]
        y = (y - br["mean"]) / jnp.sqrt(br["var"] + eps) * br["gamma"] + br["beta"]
        ys.append(silu(y))
    y = jnp.concatenate(ys, axis=-1)
    sc = raw["sc"]
    s = lax.conv_general_dilated(x_nhwc, sc["w"], (1, 1), [(0, 0), (0, 0)],
                                 dimension_numbers=('NHWC', 'HWIO', 'NHWC'),
                                 precision=hp)
    s = s + sc["b"]
    s = (s - sc["mean"]) / jnp.sqrt(sc["var"] + eps) * sc["gamma"] + sc["beta"]
    pooled = jnp.mean(y, axis=(1, 2))                                    # (B, Cout)
    h1 = jnp.maximum(jnp.dot(pooled, raw["wfc1"], precision=hp), 0.0)
    gate = jax.nn.sigmoid(jnp.dot(h1, raw["wfc2"], precision=hp))
    z = y * gate[:, None, None, :] + s
    return silu(z)


if __name__ == "__main__":
    B, Cin, Cout, H, W = 2, 4, 32, 16, 16        # mid=8, SE reduction 16 -> Cr=2
    key = jax.random.PRNGKey(0)
    kx, kp = jax.random.split(key)

    # PyTorch-convention NCHW input, transposed to NHWC for the kernel.
    x_nchw = jax.random.normal(kx, (B, Cin, H, W), jnp.float32)
    x_nhwc = jnp.transpose(x_nchw, (0, 2, 3, 1))

    raw = init_raw_params(kp, Cin, Cout)
    params = fold_params(raw, Cin, Cout)

    out = multiscale_block_pallas(x_nhwc, params)
    out = jax.block_until_ready(out)

    ref = reference(x_nhwc, raw)
    max_err = float(jnp.max(jnp.abs(out - ref)))
    # bf16 MXU operands + approx EUP reciprocal in the SiLUs -> relaxed tolerance vs f32 reference.
    assert jnp.allclose(out, ref, atol=5e-2, rtol=5e-2), f"max abs err {max_err}"
    print("KERNEL_OK")
</pallas_src>

<mosaic_0001>
module attributes {stable_mosaic.version = 11 : i64} {
  func.func @multiscale_kernel(%arg0: i32, %arg1: memref<1x256x256xbf16, #tpu.memory_space<vmem>>, %arg2: memref<256x256xbf16, #tpu.memory_space<vmem>>, %arg3: memref<1x256xf32, #tpu.memory_space<vmem>>, %arg4: memref<2x128xf32, #tpu.memory_space<vmem>>, %arg5: memref<2x128xf32, #tpu.memory_space<vmem>>, %arg6: memref<1x256x128xf32, #tpu.memory_space<vmem>>) attributes {dimension_semantics = [#tpu.dimension_semantics<parallel>], iteration_bounds = array<i64: 2>, scalar_prefetch = 0 : i64, scratch_operands = 0 : i64, tpu.core_type = #tpu.core_type<tc>, window_params = [{transform_indices = @transform_0, window_bounds = array<i64: 1, 256, 256>}, {pipeline_mode = #tpu.pipeline_mode<synchronous>, transform_indices = @transform_1, window_bounds = array<i64: 256, 256>}, {pipeline_mode = #tpu.pipeline_mode<synchronous>, transform_indices = @transform_2, window_bounds = array<i64: 1, 256>}, {pipeline_mode = #tpu.pipeline_mode<synchronous>, transform_indices = @transform_3, window_bounds = array<i64: 2, 128>}, {pipeline_mode = #tpu.pipeline_mode<synchronous>, transform_indices = @transform_4, window_bounds = array<i64: 2, 128>}, {transform_indices = @transform_5, window_bounds = array<i64: 1, 256, 128>}]} {
    %c0 = arith.constant 0 : index
    %c0_0 = arith.constant 0 : index
    %c0_1 = arith.constant 0 : index
    %0 = vector.load %arg1[%c0, %c0_0, %c0_1] : memref<1x256x256xbf16, #tpu.memory_space<vmem>>, vector<1x256x256xbf16>
    %1 = vector.shape_cast %0 : vector<1x256x256xbf16> to vector<256x256xbf16>
    %c0_2 = arith.constant 0 : index
    %c0_3 = arith.constant 0 : index
    %2 = vector.load %arg2[%c0_2, %c0_3] : memref<256x256xbf16, #tpu.memory_space<vmem>>, vector<256x256xbf16>
    %cst = arith.constant dense<0.000000e+00> : vector<256x256xf32>
    %3 = tpu.matmul %1, %2, %cst {dimension_numbers = #tpu.dot_dimension_numbers<[1], [0], [0], [1], [0, 0, 1, 1], [], []>} : vector<256x256xbf16>, vector<256x256xbf16>, vector<256x256xf32> -> vector<256x256xf32>
    %c0_4 = arith.constant 0 : index
    %c0_5 = arith.constant 0 : index
    %4 = vector.load %arg3[%c0_4, %c0_5] : memref<1x256xf32, #tpu.memory_space<vmem>>, vector<1x256xf32>
    %5 = vector.broadcast %4 : vector<1x256xf32> to vector<256x256xf32>
    %6 = arith.addf %3, %5 : vector<256x256xf32>
    %7 = vector.extract_strided_slice %6 {offsets = [0, 0], sizes = [256, 128], strides = [1, 1]} : vector<256x256xf32> to vector<256x128xf32>
    %8 = vector.extract_strided_slice %6 {offsets = [0, 128], sizes = [256, 128], strides = [1, 1]} : vector<256x256xf32> to vector<256x128xf32>
    %cst_6 = arith.constant 0.000000e+00 : f32
    %9 = vector.broadcast %cst_6 : f32 to vector<256x128xf32>
    %10 = arith.subf %9, %7 : vector<256x128xf32>
    %11 = math.exp %10 : vector<256x128xf32>
    %cst_7 = arith.constant 1.000000e+00 : f32
    %12 = vector.broadcast %cst_7 : f32 to vector<256x128xf32>
    %13 = arith.addf %12, %11 : vector<256x128xf32>
    %14 = tpu.reciprocal %13 {approx = true} : vector<256x128xf32> -> vector<256x128xf32>
    %15 = arith.mulf %7, %14 : vector<256x128xf32>
    %cst_8 = arith.constant dense<0.000000e+00> : vector<128xf32>
    %16 = vector.multi_reduction <add>, %15, %cst_8 [0] : vector<256x128xf32> to vector<128xf32>
    %17 = vector.shape_cast %16 : vector<128xf32> to vector<1x128xf32>
    %cst_9 = arith.constant 2.560000e+02 : f32
    %18 = vector.broadcast %cst_9 : f32 to vector<1x128xf32>
    %19 = arith.divf %17, %18 : vector<1x128xf32>
    %c0_10 = arith.constant 0 : index
    %c0_11 = arith.constant 0 : index
    %20 = vector.load %arg4[%c0_10, %c0_11] : memref<2x128xf32, #tpu.memory_space<vmem>>, vector<2x128xf32>
    %21 = vector.broadcast %19 : vector<1x128xf32> to vector<2x128xf32>
    %22 = arith.mulf %20, %21 : vector<2x128xf32>
    %cst_12 = arith.constant dense<0.000000e+00> : vector<2xf32>
    %23 = vector.multi_reduction <add>, %22, %cst_12 [1] : vector<2x128xf32> to vector<2xf32>
    %24 = vector.shape_cast %23 : vector<2xf32> to vector<2x1xf32>
    %cst_13 = arith.constant 0.000000e+00 : f32
    %25 = vector.broadcast %cst_13 : f32 to vector<2x1xf32>
    %26 = arith.maximumf %24, %25 : vector<2x1xf32>
    %c0_14 = arith.constant 0 : index
    %c0_15 = arith.constant 0 : index
    %27 = vector.load %arg5[%c0_14, %c0_15] : memref<2x128xf32, #tpu.memory_space<vmem>>, vector<2x128xf32>
    %28 = vector.broadcast %26 : vector<2x1xf32> to vector<2x128xf32>
    %29 = arith.mulf %28, %27 : vector<2x128xf32>
    %cst_16 = arith.constant dense<0.000000e+00> : vector<128xf32>
    %30 = vector.multi_reduction <add>, %29, %cst_16 [0] : vector<2x128xf32> to vector<128xf32>
    %31 = vector.shape_cast %30 : vector<128xf32> to vector<1x128xf32>
    %cst_17 = arith.constant 0.000000e+00 : f32
    %32 = vector.broadcast %cst_17 : f32 to vector<1x128xf32>
    %33 = arith.subf %32, %31 : vector<1x128xf32>
    %34 = math.exp %33 : vector<1x128xf32>
    %cst_18 = arith.constant 1.000000e+00 : f32
    %35 = vector.broadcast %cst_18 : f32 to vector<1x128xf32>
    %36 = arith.addf %35, %34 : vector<1x128xf32>
    %cst_19 = arith.constant 1.000000e+00 : f32
    %37 = vector.broadcast %cst_19 : f32 to vector<1x128xf32>
    %38 = arith.divf %37, %36 : vector<1x128xf32>
    %39 = vector.broadcast %38 : vector<1x128xf32> to vector<256x128xf32>
    %40 = arith.mulf %15, %39 : vector<256x128xf32>
    %41 = arith.addf %40, %8 : vector<256x128xf32>
    %cst_20 = arith.constant 0.000000e+00 : f32
    %42 = vector.broadcast %cst_20 : f32 to vector<256x128xf32>
    %43 = arith.subf %42, %41 : vector<256x128xf32>
    %44 = math.exp %43 : vector<256x128xf32>
    %cst_21 = arith.constant 1.000000e+00 : f32
    %45 = vector.broadcast %cst_21 : f32 to vector<256x128xf32>
    %46 = arith.addf %45, %44 : vector<256x128xf32>
    %47 = tpu.reciprocal %46 {approx = true} : vector<256x128xf32> -> vector<256x128xf32>
    %48 = arith.mulf %41, %47 : vector<256x128xf32>
    %c0_22 = arith.constant 0 : index
    %c0_23 = arith.constant 0 : index
    %c0_24 = arith.constant 0 : index
    %49 = vector.load %arg6[%c0_22, %c0_23, %c0_24] : memref<1x256x128xf32, #tpu.memory_space<vmem>>, vector<1x256x128xf32>
    %50 = vector.shape_cast %49 : vector<1x256x128xf32> to vector<256x128xf32>
    %51 = vector.shape_cast %48 : vector<256x128xf32> to vector<1x256x128xf32>
    tpu.vector_store %arg6[%c0_22, %c0_23, %c0_24], %51 {strides = array<i32>} : memref<1x256x128xf32, #tpu.memory_space<vmem>>, vector<1x256x128xf32>,
    return
  }
  func.func @transform_0(%arg0: i32) -> (i32, i32, i32) {
    %c0_i32 = arith.constant 0 : i32
    %c0_i32_0 = arith.constant 0 : i32
    %c0_i32_1 = arith.constant 0 : i32
    return %arg0, %c0_i32, %c0_i32_0 : i32, i32, i32
  }
  func.func @transform_1(%arg0: i32) -> (i32, i32) {
    %c0_i32 = arith.constant 0 : i32
    %c0_i32_0 = arith.constant 0 : i32
    %c0_i32_1 = arith.constant 0 : i32
    return %c0_i32, %c0_i32_0 : i32, i32
  }
  func.func @transform_2(%arg0: i32) -> (i32, i32) {
    %c0_i32 = arith.constant 0 : i32
    %c0_i32_0 = arith.constant 0 : i32
    %c0_i32_1 = arith.constant 0 : i32
    return %c0_i32, %c0_i32_0 : i32, i32
  }
  func.func @transform_3(%arg0: i32) -> (i32, i32) {
    %c0_i32 = arith.constant 0 : i32
    %c0_i32_0 = arith.constant 0 : i32
    %c0_i32_1 = arith.constant 0 : i32
    return %c0_i32, %c0_i32_0 : i32, i32
  }
  func.func @transform_4(%arg0: i32) -> (i32, i32) {
    %c0_i32 = arith.constant 0 : i32
    %c0_i32_0 = arith.constant 0 : i32
    %c0_i32_1 = arith.constant 0 : i32
    return %c0_i32, %c0_i32_0 : i32, i32
  }
  func.func @transform_5(%arg0: i32) -> (i32, i32, i32) {
    %c0_i32 = arith.constant 0 : i32
    %c0_i32_0 = arith.constant 0 : i32
    %c0_i32_1 = arith.constant 0 : i32
    return %arg0, %c0_i32, %c0_i32_0 : i32, i32, i32
  }
}

</mosaic_0001>

<llo_original>
// kernel: tpu_custom_call.1
$region0: #{tpu_custom_call.1}
  #allocation0 [shape = 'u32[]', space=smem, size = 0x4, offset = 0x4, fixed_abs, tag = 'smem constant byte address 0x4 - core index']
  #allocation1 [shape = 'u32[144,128]{1,0:T(1,128)}', space=vmem, size = 0x12000, scoped, tag = 'internal scratch']
  %s0 = inlined_call_operand.hbm [shape: bf16[2,256,256], index: 0, kind: input, shape index: {}]
  %s1 = inlined_call_operand.hbm [shape: bf16[256,256], index: 1, kind: input, shape index: {}]
  %s2 = inlined_call_operand.vmem [shape: f32[1,256], index: 2, kind: input, shape index: {}]
  %s3 = inlined_call_operand.vmem [shape: f32[2,128], index: 3, kind: input, shape index: {}]
  %s4 = inlined_call_operand.vmem [shape: f32[2,128], index: 4, kind: input, shape index: {}]
  %s5 = inlined_call_operand.hbm [shape: f32[2,256,128], index: 5, kind: output, shape index: {}]
  %s6 = sld [smem:[#allocation0]]
  $region61: #{tpu_custom_call.1} parent=0
    _
  %s8 = ssub.s32 1, %s6
  %s9 = scalar_select 0, %s8, %s6
  $region1: #{tpu_custom_call.1} parent=0
    #allocation2 [shape = 'u8[262144]{0}', space=vmem, size = 0x40000, scoped, tag = 'input window, operand 0']
    #allocation3 [shape = 's32[2]{0}', space=sflag, size = 0x8, scoped, tag = 'scoped memory for tpu_custom_call.1']
    #allocation4 [shape = 's32[2]{0}', space=sflag, size = 0x8, scoped, tag = 'scoped memory for tpu_custom_call.1']
    #allocation5 [shape = 'u8[131072]{0}', space=vmem, size = 0x20000, scoped, tag = 'input window, operand 1, single buffered']
    #allocation6 [shape = 's32[1]{0}', space=sflag, size = 0x4, scoped, tag = 'scoped memory for tpu_custom_call.1']
    #allocation7 [shape = 'u8[262144]{0}', space=vmem, size = 0x40000, scoped, tag = 'output window, operand 0']
    %10 = vsyncpa [#allocation3], 0
    %s11 = scalar_lea.sflag [#allocation3], 1
    %12 = vsyncpa %s11, 0
    %13 = vsyncpa [#allocation6], 0
    %14 = vsyncpa [#allocation4], 0
    %s15 = scalar_lea.sflag [#allocation4], 1
    %16 = vsyncpa %s15, 0
    loop: start=0, step=1, limit=4
    $region2: #{tpu_custom_call.1} parent=1 // loop_pre_header
      _
    $region3: #{tpu_custom_call.1} parent=1 // loop_header
      %s18 = sphi 0, %s22
      %p19 = scmp.ge.s32.totalorder %s18, 4
      %s28 = sphi 0, %s30
      %s31 = sphi 0, %s28
      %s32 = sphi 0, %s31
      %s48 = sphi 0, %s32
      %s52 = sphi 0, %s52
      %s54 = sphi 0, %s52
      %s55 = sphi 0, %s54
      %s69 = sphi 0, %s55
      %s73 = sphi 0, %s73
      %s75 = sphi 0, %s73
      %s76 = sphi 0, %s75
      %s90 = sphi 0, %s76
      %s94 = sphi 0, %s94
      %s96 = sphi 0, %s94
      %s97 = sphi 0, %s96
      %s111 = sphi 0, %s97
      %s115 = sphi 0, %s115
      %s117 = sphi 0, %s115
      %s118 = sphi 0, %s117
      %s132 = sphi 0, %s118
      %s138 = sphi 0, %s140
      %s141 = sphi 0, %s138
      %s142 = sphi 0, %s141
      %s158 = sphi 0, %s142
    $region4: #{tpu_custom_call.1} parent=1 // loop_header_branch
      %21 = sbr.rel (%p19) target = $region8
    $region5: #{tpu_custom_call.1} parent=1 // loop_body
      %s23 = ssub.s32 %s18, 1
      %s24 = ssub.s32 %s18, 2
      %s25 = sadd.s32 %s18, 1
      %s26 = ssub.s32 %s18, %s25
      %p27 = scmp.eq.s32.totalorder %s26, 0
      %s29 = sadd.s32 %s28, 1
      %s30 = scalar_select %p27, %s28, %s29
      %p33 = pneg %p27
      %p34 = scmp.eq.s32.totalorder %s18, 1
      %p35 = por %p33, %p34
      %p36 = scmp.ne.s32.totalorder %s28, %s31
      %p37 = scmp.eq.s32.totalorder %s18, 0
      %p38 = por %p36, %p37
      %p39 = scmp.ne.s32.totalorder %s28, %s31
      %p40 = scmp.eq.s32.totalorder %s23, 1
      %p41 = por %p39, %p40
      %p42 = scmp.ne.s32.totalorder %s31, %s32
      %p43 = scmp.eq.s32.totalorder %s23, 0
      %p44 = por %p42, %p43
      %p45 = scmp.ne.s32.totalorder %s31, %s32
      %p46 = scmp.eq.s32.totalorder %s24, 1
      %p47 = por %p45, %p46
      %p49 = scmp.ne.s32.totalorder %s32, %s48
      %p50 = scmp.eq.s32.totalorder %s24, 0
      %p51 = por %p49, %p50
      %s53 = sadd.s32 %s52, 1
      %p56 = scmp.eq.s32.totalorder %s18, 1
      %p57 = scmp.ne.s32.totalorder %s52, %s54
      %p58 = scmp.eq.s32.totalorder %s18, 0
      %p59 = por %p57, %p58
      %p60 = scmp.ne.s32.totalorder %s52, %s54
      %p61 = scmp.eq.s32.totalorder %s23, 1
      %p62 = por %p60, %p61
      %p63 = scmp.ne.s32.totalorder %s54, %s55
      %p64 = scmp.eq.s32.totalorder %s23, 0
      %p65 = por %p63, %p64
      %p66 = scmp.ne.s32.totalorder %s54, %s55
      %p67 = scmp.eq.s32.totalorder %s24, 1
      %p68 = por %p66, %p67
      %p70 = scmp.ne.s32.totalorder %s55, %s69
      %p71 = scmp.eq.s32.totalorder %s24, 0
      %p72 = por %p70, %p71
      %s74 = sadd.s32 %s73, 1
      %p77 = scmp.eq.s32.totalorder %s18, 1
      %p78 = scmp.ne.s32.totalorder %s73, %s75
      %p79 = scmp.eq.s32.totalorder %s18, 0
      %p80 = por %p78, %p79
      %p81 = scmp.ne.s32.totalorder %s73, %s75
      %p82 = scmp.eq.s32.totalorder %s23, 1
      %p83 = por %p81, %p82
      %p84 = scmp.ne.s32.totalorder %s75, %s76
      %p85 = scmp.eq.s32.totalorder %s23, 0
      %p86 = por %p84, %p85
      %p87 = scmp.ne.s32.totalorder %s75, %s76
      %p88 = scmp.eq.s32.totalorder %s24, 1
      %p89 = por %p87, %p88
      %p91 = scmp.ne.s32.totalorder %s76, %s90
      %p92 = scmp.eq.s32.totalorder %s24, 0
      %p93 = por %p91, %p92
      %s95 = sadd.s32 %s94, 1
      %p98 = scmp.eq.s32.totalorder %s18, 1
      %p99 = scmp.ne.s32.totalorder %s94, %s96
      %p100 = scmp.eq.s32.totalorder %s18, 0
      %p101 = por %p99, %p100
      %p102 = scmp.ne.s32.totalorder %s94, %s96
      %p103 = scmp.eq.s32.totalorder %s23, 1
      %p104 = por %p102, %p103
      %p105 = scmp.ne.s32.totalorder %s96, %s97
      %p106 = scmp.eq.s32.totalorder %s23, 0
      %p107 = por %p105, %p106
      %p108 = scmp.ne.s32.totalorder %s96, %s97
      %p109 = scmp.eq.s32.totalorder %s24, 1
      %p110 = por %p108, %p109
      %p112 = scmp.ne.s32.totalorder %s97, %s111
      %p113 = scmp.eq.s32.totalorder %s24, 0
      %p114 = por %p112, %p113
      %s116 = sadd.s32 %s115, 1
      %p119 = scmp.eq.s32.totalorder %s18, 1
      %p120 = scmp.ne.s32.totalorder %s115, %s117
      %p121 = scmp.eq.s32.totalorder %s18, 0
      %p122 = por %p120, %p121
      %p123 = scmp.ne.s32.totalorder %s115, %s117
      %p124 = scmp.eq.s32.totalorder %s23, 1
      %p125 = por %p123, %p124
      %p126 = scmp.ne.s32.totalorder %s117, %s118
      %p127 = scmp.eq.s32.totalorder %s23, 0
      %p128 = por %p126, %p127
      %p129 = scmp.ne.s32.totalorder %s117, %s118
      %p130 = scmp.eq.s32.totalorder %s24, 1
      %p131 = por %p129, %p130
      %p133 = scmp.ne.s32.totalorder %s118, %s132
      %p134 = scmp.eq.s32.totalorder %s24, 0
      %p135 = por %p133, %p134
      %s136 = ssub.s32 %s18, %s25
      %p137 = scmp.eq.s32.totalorder %s136, 0
      %s139 = sadd.s32 %s138, 1
      %s140 = scalar_select %p137, %s138, %s139
      %p143 = pneg %p137
      %p144 = scmp.eq.s32.totalorder %s18, 1
      %p145 = por %p143, %p144
      %p146 = scmp.ne.s32.totalorder %s138, %s141
      %p147 = scmp.eq.s32.totalorder %s18, 0
      %p148 = por %p146, %p147
      %p149 = scmp.ne.s32.totalorder %s138, %s141
      %p150 = scmp.eq.s32.totalorder %s23, 1
      %p151 = por %p149, %p150
      %p152 = scmp.ne.s32.totalorder %s141, %s142
      %p153 = scmp.eq.s32.totalorder %s23, 0
      %p154 = por %p152, %p153
      %p155 = scmp.ne.s32.totalorder %s141, %s142
      %p156 = scmp.eq.s32.totalorder %s24, 1
      %p157 = por %p155, %p156
      %p159 = scmp.ne.s32.totalorder %s142, %s158
      %p160 = scmp.eq.s32.totalorder %s24, 0
      %p161 = por %p159, %p160
      %p162 = scmp.le.s32.totalorder 1, %s18
      %p163 = scmp.lt.s32.totalorder %s18, 3
      %p164 = pnand %p162, %p163
      %p165 = pneg %p164
      // Predicated region
      $region9: #{tpu_custom_call.1} parent=5 // pred_check
        _
      $region10: #{tpu_custom_call.1} parent=5 // pred_check_branch
        %167 = sbr.rel (%p164) target = $region12
      $region11: #{tpu_custom_call.1} parent=5 // pred_region
        %s168 = ssub.s32 %s18, 1
        // Predicated region
        $region13: #{tpu_custom_call.1} parent=11 // pred_check
          %p169 = pneg %p65
        $region14: #{tpu_custom_call.1} parent=11 // pred_check_branch
          %171 = sbr.rel (%p169) target = $region16
        $region15: #{tpu_custom_call.1} parent=11 // pred_region
          %s173 = ssub.s32 4096, 4096
          %174 = vsyncadd [#allocation6], %s173
          %s175 = sshll.u32 [#allocation5], 4
          %s176 = int_to_ptr.vmem [resolvable:$true] %s175
          %181 = dma.hbm_to_vmem [thread:$0]  %s1, 4096, %s176, [#allocation6], 128, 128, 8
        $region16: #{tpu_custom_call.1} parent=11 // pred_fallthru
          _
        // Predicated region
        $region17: #{tpu_custom_call.1} parent=11 // pred_check
          %p182 = pneg %p86
        $region18: #{tpu_custom_call.1} parent=11 // pred_check_branch
          %184 = sbr.rel (%p182) target = $region20
        $region19: #{tpu_custom_call.1} parent=11 // pred_region
          _
        $region20: #{tpu_custom_call.1} parent=11 // pred_fallthru
          _
        // Predicated region
        $region21: #{tpu_custom_call.1} parent=11 // pred_check
          %p185 = pneg %p107
        $region22: #{tpu_custom_call.1} parent=11 // pred_check_branch
          %187 = sbr.rel (%p185) target = $region24
        $region23: #{tpu_custom_call.1} parent=11 // pred_region
          _
        $region24: #{tpu_custom_call.1} parent=11 // pred_fallthru
          _
        // Predicated region
        $region25: #{tpu_custom_call.1} parent=11 // pred_check
          %p188 = pneg %p128
        $region26: #{tpu_custom_call.1} parent=11 // pred_check_branch
          %190 = sbr.rel (%p188) target = $region28
        $region27: #{tpu_custom_call.1} parent=11 // pred_region
          _
        $region28: #{tpu_custom_call.1} parent=11 // pred_fallthru
          _
      $region12: #{tpu_custom_call.1} parent=5 // pred_fallthru
        _
      %p191 = scmp.lt.s32.totalorder %s18, 2
      // Predicated region
      $region29: #{tpu_custom_call.1} parent=5 // pred_check
        %p192 = pneg %p191
      $region30: #{tpu_custom_call.1} parent=5 // pred_check_branch
        %194 = sbr.rel (%p192) target = $region32
      $region31: #{tpu_custom_call.1} parent=5 // pred_region
        // Predicated region
        $region33: #{tpu_custom_call.1} parent=31 // pred_check
          %p195 = pneg %p38
        $region34: #{tpu_custom_call.1} parent=31 // pred_check_branch
          %197 = sbr.rel (%p195) target = $region36
        $region35: #{tpu_custom_call.1} parent=31 // pred_region
          %s198 = sand.u32 %s28, 1
          %s199 = scalar_lea.sflag [#allocation3], %s198
          %s200 = sand.u32 %s28, 1
          %s201 = smul.addr %s200, 256
          %s202 = scalar_lea.vmem [#allocation2], %s201
          %s204 = ssub.s32 4096, 4096
          %205 = vsyncadd %s199, %s204
          %s206 = smul.addr %s18, 64
          %s207 = smul.addr %s206, 64
          %s208 = scalar_lea.hbm %s0, %s207
          %s209 = sshll.u32 %s202, 4
          %s210 = int_to_ptr.vmem [resolvable:$true] %s209
          %215 = dma.hbm_to_vmem [thread:$0]  %s208, 4096, %s210, %s199, 128, 128, 8
        $region36: #{tpu_custom_call.1} parent=31 // pred_fallthru
          _
      $region32: #{tpu_custom_call.1} parent=5 // pred_fallthru
        _
      %p216 = scmp.le.s32.totalorder 1, %s18
      %p217 = scmp.lt.s32.totalorder %s18, 3
      %p218 = pnand %p216, %p217
      %p219 = pneg %p218
      // Predicated region
      $region37: #{tpu_custom_call.1} parent=5 // pred_check
        _
      $region38: #{tpu_custom_call.1} parent=5 // pred_check_branch
        %221 = sbr.rel (%p218) target = $region40
      $region39: #{tpu_custom_call.1} parent=5 // pred_region
        %s222 = ssub.s32 %s18, 1
        %s223 = sand.u32 %s31, 1
        %s224 = scalar_lea.sflag [#allocation3], %s223
        %s225 = sand.u32 %s31, 1
        %s226 = smul.addr %s225, 256
        %s227 = scalar_lea.vmem [#allocation2], %s226
        // Predicated region
        $region41: #{tpu_custom_call.1} parent=39 // pred_check
          %p228 = pneg %p44
        $region42: #{tpu_custom_call.1} parent=39 // pred_check_branch
          %230 = sbr.rel (%p228) target = $region44
        $region43: #{tpu_custom_call.1} parent=39 // pred_region
          %231 = dma.done %s224, 4096
        $region44: #{tpu_custom_call.1} parent=39 // pred_fallthru
          _
        // Predicated region
        $region45: #{tpu_custom_call.1} parent=39 // pred_check
          %p232 = pneg %p65
        $region46: #{tpu_custom_call.1} parent=39 // pred_check_branch
          %234 = sbr.rel (%p232) target = $region48
        $region47: #{tpu_custom_call.1} parent=39 // pred_region
          %235 = dma.done [#allocation6], 4096
        $region48: #{tpu_custom_call.1} parent=39 // pred_fallthru
          _
        %s236 = sand.u32 %s31, 1
        %s237 = scalar_lea.sflag [#allocation3], %s236
        %s238 = sand.u32 %s31, 1
        %s239 = smul.addr %s238, 256
        %s240 = scalar_lea.vmem [#allocation2], %s239
        %p241 = pneg %p44
        %p242 = pneg %p41
        %p243 = pneg %p65
        %p244 = pneg %p62
        %p245 = pneg %p86
        %p246 = pneg %p83
        %p247 = pneg %p107
        %p248 = pneg %p104
        %p249 = pneg %p128
        %p250 = pneg %p125
        %p251 = pneg %p154
        %p252 = pneg %p151
        %s253 = sand.u32 %s141, 1
        %s254 = scalar_lea.sflag [#allocation4], %s253
        %s255 = sand.u32 %s141, 1
        %s256 = smul.addr %s255, 256
        %s257 = scalar_lea.vmem [#allocation7], %s256
        %v258 = vld [vmem:[%s227] sm:$0xff]
        %v259 = vld [vmem:[%s227 + $0x8] sm:$0xff]
        %v260 = vld [vmem:[%s227 + $0x10] sm:$0xff]
        %v261 = vld [vmem:[%s227 + $0x18] sm:$0xff]
        %v262 = vld [vmem:[%s227 + $0x20] sm:$0xff]
        %v263 = vld [vmem:[%s227 + $0x28] sm:$0xff]
        %v264 = vld [vmem:[%s227 + $0x30] sm:$0xff]
        %v265 = vld [vmem:[%s227 + $0x38] sm:$0xff]
        %v266 = vld [vmem:[%s227 + $0x40] sm:$0xff]
        %v267 = vld [vmem:[%s227 + $0x48] sm:$0xff]
        %v268 = vld [vmem:[%s227 + $0x50] sm:$0xff]
        %v269 = vld [vmem:[%s227 + $0x58] sm:$0xff]
        %v270 = vld [vmem:[%s227 + $0x60] sm:$0xff]
        %v271 = vld [vmem:[%s227 + $0x68] sm:$0xff]
        %v272 = vld [vmem:[%s227 + $0x70] sm:$0xff]
        %v273 = vld [vmem:[%s227 + $0x78] sm:$0xff]
        %v274 = vld [vmem:[%s227 + $0x80] sm:$0xff]
        %v275 = vld [vmem:[%s227 + $0x88] sm:$0xff]
        %v276 = vld [vmem:[%s227 + $0x90] sm:$0xff]
        %v277 = vld [vmem:[%s227 + $0x98] sm:$0xff]
        %v278 = vld [vmem:[%s227 + $0xa0] sm:$0xff]
        %v279 = vld [vmem:[%s227 + $0xa8] sm:$0xff]
        %v280 = vld [vmem:[%s227 + $0xb0] sm:$0xff]
        %v281 = vld [vmem:[%s227 + $0xb8] sm:$0xff]
        %v282 = vld [vmem:[%s227 + $0xc0] sm:$0xff]
        %v283 = vld [vmem:[%s227 + $0xc8] sm:$0xff]
        %v284 = vld [vmem:[%s227 + $0xd0] sm:$0xff]
        %v285 = vld [vmem:[%s227 + $0xd8] sm:$0xff]
        %v286 = vld [vmem:[%s227 + $0xe0] sm:$0xff]
        %v287 = vld [vmem:[%s227 + $0xe8] sm:$0xff]
        %v288 = vld [vmem:[%s227 + $0xf0] sm:$0xff]
        %v289 = vld [vmem:[%s227 + $0xf8] sm:$0xff]
        %v290 = vld [vmem:[#allocation5] sm:$0xff]
        %v291 = vld [vmem:[#allocation5 + $0x8] sm:$0xff]
        %v292 = vld [vmem:[#allocation5 + $0x10] sm:$0xff]
        %v293 = vld [vmem:[#allocation5 + $0x18] sm:$0xff]
        %v294 = vld [vmem:[#allocation5 + $0x20] sm:$0xff]
        %v295 = vld [vmem:[#allocation5 + $0x28] sm:$0xff]
        %v296 = vld [vmem:[#allocation5 + $0x30] sm:$0xff]
        %v297 = vld [vmem:[#allocation5 + $0x38] sm:$0xff]
        %v298 = vld [vmem:[#allocation5 + $0x40] sm:$0xff]
        %v299 = vld [vmem:[#allocation5 + $0x48] sm:$0xff]
        %v300 = vld [vmem:[#allocation5 + $0x50] sm:$0xff]
        %v301 = vld [vmem:[#allocation5 + $0x58] sm:$0xff]
        %v302 = vld [vmem:[#allocation5 + $0x60] sm:$0xff]
        %v303 = vld [vmem:[#allocation5 + $0x68] sm:$0xff]
        %v304 = vld [vmem:[#allocation5 + $0x70] sm:$0xff]
        %v305 = vld [vmem:[#allocation5 + $0x78] sm:$0xff]
        %v306 = vld [vmem:[#allocation5 + $0x80] sm:$0xff]
        %v307 = vld [vmem:[#allocation5 + $0x88] sm:$0xff]
        %v308 = vld [vmem:[#allocation5 + $0x90] sm:$0xff]
        %v309 = vld [vmem:[#allocation5 + $0x98] sm:$0xff]
        %v310 = vld [vmem:[#allocation5 + $0xa0] sm:$0xff]
        %v311 = vld [vmem:[#allocation5 + $0xa8] sm:$0xff]
        %v312 = vld [vmem:[#allocation5 + $0xb0] sm:$0xff]
        %v313 = vld [vmem:[#allocation5 + $0xb8] sm:$0xff]
        %v314 = vld [vmem:[#allocation5 + $0xc0] sm:$0xff]
        %v315 = vld [vmem:[#allocation5 + $0xc8] sm:$0xff]
        %v316 = vld [vmem:[#allocation5 + $0xd0] sm:$0xff]
        %v317 = vld [vmem:[#allocation5 + $0xd8] sm:$0xff]
        %v318 = vld [vmem:[#allocation5 + $0xe0] sm:$0xff]
        %v319 = vld [vmem:[#allocation5 + $0xe8] sm:$0xff]
        %v320 = vld [vmem:[#allocation5 + $0xf0] sm:$0xff]
        %v321 = vld [vmem:[#allocation5 + $0xf8] sm:$0xff]
        %v322 = vld [vmem:[%s2] sm:$0x3]
        %v324 = vlaneseq
        %v325 = vshrl.u32 %v324, 7
        %v326 = vsub.s32 0, %v325
        %v327 = vrot.slane %v322, %v326
        %v328 = vlaneseq
        %v329 = vshrl.u32 %v328, 7
        %v330 = vsub.s32 1, %v329
        %v331 = vrot.slane %v322, %v330
        %v366 = vunpack.c.l.b16 %v258
        %v367 = vunpack.c.h.b16 %v258
        %v368 = vunpack.c.l.b16 %v259
        %v369 = vunpack.c.h.b16 %v259
        %v370 = vunpack.c.l.b16 %v260
        %v371 = vunpack.c.h.b16 %v260
        %v372 = vunpack.c.l.b16 %v261
        %v373 = vunpack.c.h.b16 %v261
        %v374 = vunpack.c.l.b16 %v262
        %v375 = vunpack.c.h.b16 %v262
        %v376 = vunpack.c.l.b16 %v263
        %v377 = vunpack.c.h.b16 %v263
        %v378 = vunpack.c.l.b16 %v264
        %v379 = vunpack.c.h.b16 %v264
        %v380 = vunpack.c.l.b16 %v265
        %v381 = vunpack.c.h.b16 %v265
        %v382 = vunpack.c.l.b16 %v266
        %v383 = vunpack.c.h.b16 %v266
        %v384 = vunpack.c.l.b16 %v267
        %v385 = vunpack.c.h.b16 %v267
        %v386 = vunpack.c.l.b16 %v268
        %v387 = vunpack.c.h.b16 %v268
        %v388 = vunpack.c.l.b16 %v269
        %v389 = vunpack.c.h.b16 %v269
        %v390 = vunpack.c.l.b16 %v270
        %v391 = vunpack.c.h.b16 %v270
        %v392 = vunpack.c.l.b16 %v271
        %v393 = vunpack.c.h.b16 %v271
        %v394 = vunpack.c.l.b16 %v272
        %v395 = vunpack.c.h.b16 %v272
        %v396 = vunpack.c.l.b16 %v273
        %v397 = vunpack.c.h.b16 %v273
        %v398 = vunpack.c.l.b16 %v274
        %v399 = vunpack.c.h.b16 %v274
        %v400 = vunpack.c.l.b16 %v275
        %v401 = vunpack.c.h.b16 %v275
        %v402 = vunpack.c.l.b16 %v276
        %v403 = vunpack.c.h.b16 %v276
        %v404 = vunpack.c.l.b16 %v277
        %v405 = vunpack.c.h.b16 %v277
        %v406 = vunpack.c.l.b16 %v278
        %v407 = vunpack.c.h.b16 %v278
        %v408 = vunpack.c.l.b16 %v279
        %v409 = vunpack.c.h.b16 %v279
        %v410 = vunpack.c.l.b16 %v280
        %v411 = vunpack.c.h.b16 %v280
        %v412 = vunpack.c.l.b16 %v281
        %v413 = vunpack.c.h.b16 %v281
        %v414 = vunpack.c.l.b16 %v282
        %v415 = vunpack.c.h.b16 %v282
        %v416 = vunpack.c.l.b16 %v283
        %v417 = vunpack.c.h.b16 %v283
        %v418 = vunpack.c.l.b16 %v284
        %v419 = vunpack.c.h.b16 %v284
        %v420 = vunpack.c.l.b16 %v285
        %v421 = vunpack.c.h.b16 %v285
        %v422 = vunpack.c.l.b16 %v286
        %v423 = vunpack.c.h.b16 %v286
        %v424 = vunpack.c.l.b16 %v287
        %v425 = vunpack.c.h.b16 %v287
        %v426 = vunpack.c.l.b16 %v288
        %v427 = vunpack.c.h.b16 %v288
        %v428 = vunpack.c.l.b16 %v289
        %v429 = vunpack.c.h.b16 %v289
        %v430 = vpack.c.b16 %v368, %v366
        %v431 = vpack.c.b16 %v369, %v367
        %v432 = vpack.c.b16 %v372, %v370
        %v433 = vpack.c.b16 %v373, %v371
        %v434 = vpack.c.b16 %v376, %v374
        %v435 = vpack.c.b16 %v377, %v375
        %v436 = vpack.c.b16 %v380, %v378
        %v437 = vpack.c.b16 %v381, %v379
        %v438 = vpack.c.b16 %v384, %v382
        %v439 = vpack.c.b16 %v385, %v383
        %v440 = vpack.c.b16 %v388, %v386
        %v441 = vpack.c.b16 %v389, %v387
        %v442 = vpack.c.b16 %v392, %v390
        %v443 = vpack.c.b16 %v393, %v391
        %v444 = vpack.c.b16 %v396, %v394
        %v445 = vpack.c.b16 %v397, %v395
        %v446 = vpack.c.b16 %v400, %v398
        %v447 = vpack.c.b16 %v401, %v399
        %v448 = vpack.c.b16 %v404, %v402
        %v449 = vpack.c.b16 %v405, %v403
        %v450 = vpack.c.b16 %v408, %v406
        %v451 = vpack.c.b16 %v409, %v407
        %v452 = vpack.c.b16 %v412, %v410
        %v453 = vpack.c.b16 %v413, %v411
        %v454 = vpack.c.b16 %v416, %v414
        %v455 = vpack.c.b16 %v417, %v415
        %v456 = vpack.c.b16 %v420, %v418
        %v457 = vpack.c.b16 %v421, %v419
        %v458 = vpack.c.b16 %v424, %v422
        %v459 = vpack.c.b16 %v425, %v423
        %v460 = vpack.c.b16 %v428, %v426
        %v461 = vpack.c.b16 %v429, %v427
        %v526 = vunpack.c.l.b16 %v290
        %v527 = vunpack.c.h.b16 %v290
        %v528 = vunpack.c.l.b16 %v291
        %v529 = vunpack.c.h.b16 %v291
        %v530 = vunpack.c.l.b16 %v292
        %v531 = vunpack.c.h.b16 %v292
        %v532 = vunpack.c.l.b16 %v293
        %v533 = vunpack.c.h.b16 %v293
        %v534 = vunpack.c.l.b16 %v294
        %v535 = vunpack.c.h.b16 %v294
        %v536 = vunpack.c.l.b16 %v295
        %v537 = vunpack.c.h.b16 %v295
        %v538 = vunpack.c.l.b16 %v296
        %v539 = vunpack.c.h.b16 %v296
        %v540 = vunpack.c.l.b16 %v297
        %v541 = vunpack.c.h.b16 %v297
        %v542 = vunpack.c.l.b16 %v298
        %v543 = vunpack.c.h.b16 %v298
        %v544 = vunpack.c.l.b16 %v299
        %v545 = vunpack.c.h.b16 %v299
        %v546 = vunpack.c.l.b16 %v300
        %v547 = vunpack.c.h.b16 %v300
        %v548 = vunpack.c.l.b16 %v301
        %v549 = vunpack.c.h.b16 %v301
        %v550 = vunpack.c.l.b16 %v302
        %v551 = vunpack.c.h.b16 %v302
        %v552 = vunpack.c.l.b16 %v303
        %v553 = vunpack.c.h.b16 %v303
        %v554 = vunpack.c.l.b16 %v304
        %v555 = vunpack.c.h.b16 %v304
        %v556 = vunpack.c.l.b16 %v305
        %v557 = vunpack.c.h.b16 %v305
        %v558 = vunpack.c.l.b16 %v306
        %v559 = vunpack.c.h.b16 %v306
        %v560 = vunpack.c.l.b16 %v307
        %v561 = vunpack.c.h.b16 %v307
        %v562 = vunpack.c.l.b16 %v308
        %v563 = vunpack.c.h.b16 %v308
        %v564 = vunpack.c.l.b16 %v309
        %v565 = vunpack.c.h.b16 %v309
        %v566 = vunpack.c.l.b16 %v310
        %v567 = vunpack.c.h.b16 %v310
        %v568 = vunpack.c.l.b16 %v311
        %v569 = vunpack.c.h.b16 %v311
        %v570 = vunpack.c.l.b16 %v312
        %v571 = vunpack.c.h.b16 %v312
        %v572 = vunpack.c.l.b16 %v313
        %v573 = vunpack.c.h.b16 %v313
        %v574 = vunpack.c.l.b16 %v314
        %v575 = vunpack.c.h.b16 %v314
        %v576 = vunpack.c.l.b16 %v315
        %v577 = vunpack.c.h.b16 %v315
        %v578 = vunpack.c.l.b16 %v316
        %v579 = vunpack.c.h.b16 %v316
        %v580 = vunpack.c.l.b16 %v317
        %v581 = vunpack.c.h.b16 %v317
        %v582 = vunpack.c.l.b16 %v318
        %v583 = vunpack.c.h.b16 %v318
        %v584 = vunpack.c.l.b16 %v319
        %v585 = vunpack.c.h.b16 %v319
        %v586 = vunpack.c.l.b16 %v320
        %v587 = vunpack.c.h.b16 %v320
        %v588 = vunpack.c.l.b16 %v321
        %v589 = vunpack.c.h.b16 %v321
        %v590 = vpack.c.b16 %v528, %v526
        %v591 = vpack.c.b16 %v529, %v527
        %v592 = vpack.c.b16 %v532, %v530
        %v593 = vpack.c.b16 %v533, %v531
        %v594 = vpack.c.b16 %v536, %v534
        %v595 = vpack.c.b16 %v537, %v535
        %v596 = vpack.c.b16 %v540, %v538
        %v597 = vpack.c.b16 %v541, %v539
        %v598 = vpack.c.b16 %v544, %v542
        %v599 = vpack.c.b16 %v545, %v543
        %v600 = vpack.c.b16 %v548, %v546
        %v601 = vpack.c.b16 %v549, %v547
        %v602 = vpack.c.b16 %v552, %v550
        %v603 = vpack.c.b16 %v553, %v551
        %v604 = vpack.c.b16 %v556, %v554
        %v605 = vpack.c.b16 %v557, %v555
        %v606 = vpack.c.b16 %v560, %v558
        %v607 = vpack.c.b16 %v561, %v559
        %v608 = vpack.c.b16 %v564, %v562
        %v609 = vpack.c.b16 %v565, %v563
        %v610 = vpack.c.b16 %v568, %v566
        %v611 = vpack.c.b16 %v569, %v567
        %v612 = vpack.c.b16 %v572, %v570
        %v613 = vpack.c.b16 %v573, %v571
        %v614 = vpack.c.b16 %v576, %v574
        %v615 = vpack.c.b16 %v577, %v575
        %v616 = vpack.c.b16 %v580, %v578
        %v617 = vpack.c.b16 %v581, %v579
        %v618 = vpack.c.b16 %v584, %v582
        %v619 = vpack.c.b16 %v585, %v583
        %v620 = vpack.c.b16 %v588, %v586
        %v621 = vpack.c.b16 %v589, %v587
        %654 = vmatprep.subr.bf16.mxu0 %v591
        %655 = vmatpush1.bf16.msra.mxu0 %v590
        %656 = vmatprep.subr.bf16.mxu0 %v593
        %657 = vmatpush1.bf16.msra.mxu0 %v592
        %658 = vmatprep.subr.bf16.mxu0 %v595
        %659 = vmatpush1.bf16.msra.mxu0 %v594
        %660 = vmatprep.subr.bf16.mxu0 %v597
        %661 = vmatpush1.bf16.msra.mxu0 %v596
        %662 = vmatprep.subr.bf16.mxu0 %v599
        %663 = vmatpush1.bf16.msra.mxu0 %v598
        %664 = vmatprep.subr.bf16.mxu0 %v601
        %665 = vmatpush1.bf16.msra.mxu0 %v600
        %666 = vmatprep.subr.bf16.mxu0 %v603
        %667 = vmatpush1.bf16.msra.mxu0 %v602
        %668 = vmatprep.subr.bf16.mxu0 %v605
        %669 = vmatpush1.bf16.msra.mxu0 %v604
        %670 = vmatprep.subr.bf16.mxu0 %v607
        %671 = vmatpush1.bf16.msra.mxu0 %v606
        %672 = vmatprep.subr.bf16.mxu0 %v609
        %673 = vmatpush1.bf16.msra.mxu0 %v608
        %674 = vmatprep.subr.bf16.mxu0 %v611
        %675 = vmatpush1.bf16.msra.mxu0 %v610
        %676 = vmatprep.subr.bf16.mxu0 %v613
        %677 = vmatpush1.bf16.msra.mxu0 %v612
        %678 = vmatprep.subr.bf16.mxu0 %v615
        %679 = vmatpush1.bf16.msra.mxu0 %v614
        %680 = vmatprep.subr.bf16.mxu0 %v617
        %681 = vmatpush1.bf16.msra.mxu0 %v616
        %682 = vmatprep.subr.bf16.mxu0 %v619
        %683 = vmatpush1.bf16.msra.mxu0 %v618
        %684 = vmatprep.subr.bf16.mxu0 %v621
        %685 = vmatpush1.bf16.msra.mxu0 %v620
        %686 = vmatprep.mubr.bf16.mxu0 %v431
        %687 = vmatmul.mubr.bf16.gmra.mrb[0].mxu0 %v430
        %v688 = vpop.f32.mrb[0].mxu0
        %v689 = vadd.f32 %v327, %v688
        %v690 = vpop.f32.mrb[0].mxu0
        %v691 = vadd.f32 %v331, %v690
        %v692 = vpop.f32.mrb[0].mxu0
        %v693 = vadd.f32 %v327, %v692
        %v694 = vpop.f32.mrb[0].mxu0
        %v695 = vadd.f32 %v331, %v694
        %696 = vmatprep.mubr.bf16.mxu0 %v433
        %697 = vmatmul.mubr.bf16.gmra.mrb[0].mxu0 %v432
        %v698 = vpop.f32.mrb[0].mxu0
        %v699 = vadd.f32 %v327, %v698
        %v700 = vpop.f32.mrb[0].mxu0
        %v701 = vadd.f32 %v331, %v700
        %v702 = vpop.f32.mrb[0].mxu0
        %v703 = vadd.f32 %v327, %v702
        %v704 = vpop.f32.mrb[0].mxu0
        %v705 = vadd.f32 %v331, %v704
        %706 = vmatprep.mubr.bf16.mxu0 %v435
        %707 = vmatmul.mubr.bf16.gmra.mrb[0].mxu0 %v434
        %v708 = vpop.f32.mrb[0].mxu0
        %v709 = vadd.f32 %v327, %v708
        %v710 = vpop.f32.mrb[0].mxu0
        %v711 = vadd.f32 %v331, %v710
        %v712 = vpop.f32.mrb[0].mxu0
        %v713 = vadd.f32 %v327, %v712
        %v714 = vpop.f32.mrb[0].mxu0
        %v715 = vadd.f32 %v331, %v714
        %716 = vmatprep.mubr.bf16.mxu0 %v437
        %717 = vmatmul.mubr.bf16.gmra.mrb[0].mxu0 %v436
        %v718 = vpop.f32.mrb[0].mxu0
        %v719 = vadd.f32 %v327, %v718
        %v720 = vpop.f32.mrb[0].mxu0
        %v721 = vadd.f32 %v331, %v720
        %v722 = vpop.f32.mrb[0].mxu0
        %v723 = vadd.f32 %v327, %v722
        %v724 = vpop.f32.mrb[0].mxu0
        %v725 = vadd.f32 %v331, %v724
        %726 = vmatprep.mubr.bf16.mxu0 %v439
        %727 = vmatmul.mubr.bf16.gmra.mrb[0].mxu0 %v438
        %v728 = vpop.f32.mrb[0].mxu0
        %v729 = vadd.f32 %v327, %v728
        %v730 = vpop.f32.mrb[0].mxu0
        %v731 = vadd.f32 %v331, %v730
        %v732 = vpop.f32.mrb[0].mxu0
        %v733 = vadd.f32 %v327, %v732
        %v734 = vpop.f32.mrb[0].mxu0
        %v735 = vadd.f32 %v331, %v734
        %736 = vmatprep.mubr.bf16.mxu0 %v441
        %737 = vmatmul.mubr.bf16.gmra.mrb[0].mxu0 %v440
        %v738 = vpop.f32.mrb[0].mxu0
        %v739 = vadd.f32 %v327, %v738
        %v740 = vpop.f32.mrb[0].mxu0
        %v741 = vadd.f32 %v331, %v740
        %v742 = vpop.f32.mrb[0].mxu0
        %v743 = vadd.f32 %v327, %v742
        %v744 = vpop.f32.mrb[0].mxu0
        %v745 = vadd.f32 %v331, %v744
        %746 = vmatprep.mubr.bf16.mxu0 %v443
        %747 = vmatmul.mubr.bf16.gmra.mrb[0].mxu0 %v442
        %v748 = vpop.f32.mrb[0].mxu0
        %v749 = vadd.f32 %v327, %v748
        %v750 = vpop.f32.mrb[0].mxu0
        %v751 = vadd.f32 %v331, %v750
        %v752 = vpop.f32.mrb[0].mxu0
        %v753 = vadd.f32 %v327, %v752
        %v754 = vpop.f32.mrb[0].mxu0
        %v755 = vadd.f32 %v331, %v754
        %756 = vmatprep.mubr.bf16.mxu0 %v445
        %757 = vmatmul.mubr.bf16.gmra.mrb[0].mxu0 %v444
        %v758 = vpop.f32.mrb[0].mxu0
        %v759 = vadd.f32 %v327, %v758
        %v760 = vpop.f32.mrb[0].mxu0
        %v761 = vadd.f32 %v331, %v760
        %v762 = vpop.f32.mrb[0].mxu0
        %v763 = vadd.f32 %v327, %v762
        %v764 = vpop.f32.mrb[0].mxu0
        %v765 = vadd.f32 %v331, %v764
        %766 = vmatprep.mubr.bf16.mxu0 %v447
        %767 = vmatmul.mubr.bf16.gmra.mrb[0].mxu0 %v446
        %v768 = vpop.f32.mrb[0].mxu0
        %v769 = vadd.f32 %v327, %v768
        %v770 = vpop.f32.mrb[0].mxu0
        %v771 = vadd.f32 %v331, %v770
        %v772 = vpop.f32.mrb[0].mxu0
        %v773 = vadd.f32 %v327, %v772
        %v774 = vpop.f32.mrb[0].mxu0
        %v775 = vadd.f32 %v331, %v774
        %776 = vmatprep.mubr.bf16.mxu0 %v449
        %777 = vmatmul.mubr.bf16.gmra.mrb[0].mxu0 %v448
        %v778 = vpop.f32.mrb[0].mxu0
        %v779 = vadd.f32 %v327, %v778
        %v780 = vpop.f32.mrb[0].mxu0
        %v781 = vadd.f32 %v331, %v780
        %v782 = vpop.f32.mrb[0].mxu0
        %v783 = vadd.f32 %v327, %v782
        %v784 = vpop.f32.mrb[0].mxu0
        %v785 = vadd.f32 %v331, %v784
        %786 = vmatprep.mubr.bf16.mxu0 %v451
        %787 = vmatmul.mubr.bf16.gmra.mrb[0].mxu0 %v450
        %v788 = vpop.f32.mrb[0].mxu0
        %v789 = vadd.f32 %v327, %v788
        %v790 = vpop.f32.mrb[0].mxu0
        %v791 = vadd.f32 %v331, %v790
        %v792 = vpop.f32.mrb[0].mxu0
        %v793 = vadd.f32 %v327, %v792
        %v794 = vpop.f32.mrb[0].mxu0
        %v795 = vadd.f32 %v331, %v794
        %796 = vmatprep.mubr.bf16.mxu0 %v453
        %797 = vmatmul.mubr.bf16.gmra.mrb[0].mxu0 %v452
        %v798 = vpop.f32.mrb[0].mxu0
        %v799 = vadd.f32 %v327, %v798
        %v800 = vpop.f32.mrb[0].mxu0
        %v801 = vadd.f32 %v331, %v800
        %v802 = vpop.f32.mrb[0].mxu0
        %v803 = vadd.f32 %v327, %v802
        %v804 = vpop.f32.mrb[0].mxu0
        %v805 = vadd.f32 %v331, %v804
        %806 = vmatprep.mubr.bf16.mxu0 %v455
        %807 = vmatmul.mubr.bf16.gmra.mrb[0].mxu0 %v454
        %v808 = vpop.f32.mrb[0].mxu0
        %v809 = vadd.f32 %v327, %v808
        %v810 = vpop.f32.mrb[0].mxu0
        %v811 = vadd.f32 %v331, %v810
        %v812 = vpop.f32.mrb[0].mxu0
        %v813 = vadd.f32 %v327, %v812
        %v814 = vpop.f32.mrb[0].mxu0
        %v815 = vadd.f32 %v331, %v814
        %816 = vmatprep.mubr.bf16.mxu0 %v457
        %817 = vmatmul.mubr.bf16.gmra.mrb[0].mxu0 %v456
        %v818 = vpop.f32.mrb[0].mxu0
        %v819 = vadd.f32 %v327, %v818
        %v820 = vpop.f32.mrb[0].mxu0
        %v821 = vadd.f32 %v331, %v820
        %v822 = vpop.f32.mrb[0].mxu0
        %v823 = vadd.f32 %v327, %v822
        %v824 = vpop.f32.mrb[0].mxu0
        %v825 = vadd.f32 %v331, %v824
        %826 = vmatprep.mubr.bf16.mxu0 %v459
        %827 = vmatmul.mubr.bf16.gmra.mrb[0].mxu0 %v458
        %v828 = vpop.f32.mrb[0].mxu0
        %v829 = vadd.f32 %v327, %v828
        %v830 = vpop.f32.mrb[0].mxu0
        %v831 = vadd.f32 %v331, %v830
        %v832 = vpop.f32.mrb[0].mxu0
        %v833 = vadd.f32 %v327, %v832
        %v834 = vpop.f32.mrb[0].mxu0
        %v835 = vadd.f32 %v331, %v834
        %836 = vmatprep.mubr.bf16.mxu0 %v461
        %837 = vmatmul.mubr.bf16.gmra.mrb[0].mxu0 %v460
        %v838 = vpop.f32.mrb[0].mxu0
        %v839 = vadd.f32 %v327, %v838
        %v840 = vpop.f32.mrb[0].mxu0
        %v841 = vadd.f32 %v331, %v840
        %v842 = vpop.f32.mrb[0].mxu0
        %v843 = vadd.f32 %v327, %v842
        %v844 = vpop.f32.mrb[0].mxu0
        %v845 = vadd.f32 %v331, %v844
        %846 = vdwg.mxu0
        %v847 = vsub.f32 0.0, %v689
        %v848 = vsub.f32 0.0, %v693
        %v849 = vsub.f32 0.0, %v699
        %v850 = vsub.f32 0.0, %v703
        %v851 = vsub.f32 0.0, %v709
        %v852 = vsub.f32 0.0, %v713
        %v853 = vsub.f32 0.0, %v719
        %v854 = vsub.f32 0.0, %v723
        %v855 = vsub.f32 0.0, %v729
        %v856 = vsub.f32 0.0, %v733
        %v857 = vsub.f32 0.0, %v739
        %v858 = vsub.f32 0.0, %v743
        %v859 = vsub.f32 0.0, %v749
        %v860 = vsub.f32 0.0, %v753
        %v861 = vsub.f32 0.0, %v759
        %v862 = vsub.f32 0.0, %v763
        %v863 = vsub.f32 0.0, %v769
        %v864 = vsub.f32 0.0, %v773
        %v865 = vsub.f32 0.0, %v779
        %v866 = vsub.f32 0.0, %v783
        %v867 = vsub.f32 0.0, %v789
        %v868 = vsub.f32 0.0, %v793
        %v869 = vsub.f32 0.0, %v799
        %v870 = vsub.f32 0.0, %v803
        %v871 = vsub.f32 0.0, %v809
        %v872 = vsub.f32 0.0, %v813
        %v873 = vsub.f32 0.0, %v819
        %v874 = vsub.f32 0.0, %v823
        %v875 = vsub.f32 0.0, %v829
        %v876 = vsub.f32 0.0, %v833
        %v877 = vsub.f32 0.0, %v839
        %v878 = vsub.f32 0.0, %v843
        %v879 = vmul.f32 %v847, 1.442695
        %v880 = vpow.pop %v879
        %v881 = vmul.f32 %v848, 1.442695
        %v882 = vpow.pop %v881
        %v883 = vmul.f32 %v849, 1.442695
        %v884 = vpow.pop %v883
        %v885 = vmul.f32 %v850, 1.442695
        %v886 = vpow.pop %v885
        %v887 = vmul.f32 %v851, 1.442695
        %v888 = vpow.pop %v887
        %v889 = vmul.f32 %v852, 1.442695
        %v890 = vpow.pop %v889
        %v891 = vmul.f32 %v853, 1.442695
        %v892 = vpow.pop %v891
        %v893 = vmul.f32 %v854, 1.442695
        %v894 = vpow.pop %v893
        %v895 = vmul.f32 %v855, 1.442695
        %v896 = vpow.pop %v895
        %v897 = vmul.f32 %v856, 1.442695
        %v898 = vpow.pop %v897
        %v899 = vmul.f32 %v857, 1.442695
        %v900 = vpow.pop %v899
        %v901 = vmul.f32 %v858, 1.442695
        %v902 = vpow.pop %v901
        %v903 = vmul.f32 %v859, 1.442695
        %v904 = vpow.pop %v903
        %v905 = vmul.f32 %v860, 1.442695
        %v906 = vpow.pop %v905
        %v907 = vmul.f32 %v861, 1.442695
        %v908 = vpow.pop %v907
        %v909 = vmul.f32 %v862, 1.442695
        %v910 = vpow.pop %v909
        %v911 = vmul.f32 %v863, 1.442695
        %v912 = vpow.pop %v911
        %v913 = vmul.f32 %v864, 1.442695
        %v914 = vpow.pop %v913
        %v915 = vmul.f32 %v865, 1.442695
        %v916 = vpow.pop %v915
        %v917 = vmul.f32 %v866, 1.442695
        %v918 = vpow.pop %v917
        %v919 = vmul.f32 %v867, 1.442695
        %v920 = vpow.pop %v919
        %v921 = vmul.f32 %v868, 1.442695
        %v922 = vpow.pop %v921
        %v923 = vmul.f32 %v869, 1.442695
        %v924 = vpow.pop %v923
        %v925 = vmul.f32 %v870, 1.442695
        %v926 = vpow.pop %v925
        %v927 = vmul.f32 %v871, 1.442695
        %v928 = vpow.pop %v927
        %v929 = vmul.f32 %v872, 1.442695
        %v930 = vpow.pop %v929
        %v931 = vmul.f32 %v873, 1.442695
        %v932 = vpow.pop %v931
        %v933 = vmul.f32 %v874, 1.442695
        %v934 = vpow.pop %v933
        %v935 = vmul.f32 %v875, 1.442695
        %v936 = vpow.pop %v935
        %v937 = vmul.f32 %v876, 1.442695
        %v938 = vpow.pop %v937
        %v939 = vmul.f32 %v877, 1.442695
        %v940 = vpow.pop %v939
        %v941 = vmul.f32 %v878, 1.442695
        %v942 = vpow.pop %v941
        %v943 = vadd.f32 %v880, 1.0
        %v944 = vadd.f32 %v882, 1.0
        %v945 = vadd.f32 %v884, 1.0
        %v946 = vadd.f32 %v886, 1.0
        %v947 = vadd.f32 %v888, 1.0
        %v948 = vadd.f32 %v890, 1.0
        %v949 = vadd.f32 %v892, 1.0
        %v950 = vadd.f32 %v894, 1.0
        %v951 = vadd.f32 %v896, 1.0
        %v952 = vadd.f32 %v898, 1.0
        %v953 = vadd.f32 %v900, 1.0
        %v954 = vadd.f32 %v902, 1.0
        %v955 = vadd.f32 %v904, 1.0
        %v956 = vadd.f32 %v906, 1.0
        %v957 = vadd.f32 %v908, 1.0
        %v958 = vadd.f32 %v910, 1.0
        %v959 = vadd.f32 %v912, 1.0
        %v960 = vadd.f32 %v914, 1.0
        %v961 = vadd.f32 %v916, 1.0
        %v962 = vadd.f32 %v918, 1.0
        %v963 = vadd.f32 %v920, 1.0
        %v964 = vadd.f32 %v922, 1.0
        %v965 = vadd.f32 %v924, 1.0
        %v966 = vadd.f32 %v926, 1.0
        %v967 = vadd.f32 %v928, 1.0
        %v968 = vadd.f32 %v930, 1.0
        %v969 = vadd.f32 %v932, 1.0
        %v970 = vadd.f32 %v934, 1.0
        %v971 = vadd.f32 %v936, 1.0
        %v972 = vadd.f32 %v938, 1.0
        %v973 = vadd.f32 %v940, 1.0
        %v974 = vadd.f32 %v942, 1.0
        %v975 = vrcp.pop %v943
        %v976 = vrcp.pop %v944
        %v977 = vrcp.pop %v945
        %v978 = vrcp.pop %v946
        %v979 = vrcp.pop %v947
        %v980 = vrcp.pop %v948
        %v981 = vrcp.pop %v949
        %v982 = vrcp.pop %v950
        %v983 = vrcp.pop %v951
        %v984 = vrcp.pop %v952
        %v985 = vrcp.pop %v953
        %v986 = vrcp.pop %v954
        %v987 = vrcp.pop %v955
        %v988 = vrcp.pop %v956
        %v989 = vrcp.pop %v957
        %v990 = vrcp.pop %v958
        %v991 = vrcp.pop %v959
        %v992 = vrcp.pop %v960
        %v993 = vrcp.pop %v961
        %v994 = vrcp.pop %v962
        %v995 = vrcp.pop %v963
        %v996 = vrcp.pop %v964
        %v997 = vrcp.pop %v965
        %v998 = vrcp.pop %v966
        %v999 = vrcp.pop %v967
        %v1000 = vrcp.pop %v968
        %v1001 = vrcp.pop %v969
        %v1002 = vrcp.pop %v970
        %v1003 = vrcp.pop %v971
        %v1004 = vrcp.pop %v972
        %v1005 = vrcp.pop %v973
        %v1006 = vrcp.pop %v974
        %v1007 = vmul.f32 %v689, %v975
        %v1008 = vmul.f32 %v693, %v976
        %v1009 = vmul.f32 %v699, %v977
        %v1010 = vmul.f32 %v703, %v978
        %v1011 = vmul.f32 %v709, %v979
        %v1012 = vmul.f32 %v713, %v980
        %v1013 = vmul.f32 %v719, %v981
        %v1014 = vmul.f32 %v723, %v982
        %v1015 = vmul.f32 %v729, %v983
        %v1016 = vmul.f32 %v733, %v984
        %v1017 = vmul.f32 %v739, %v985
        %v1018 = vmul.f32 %v743, %v986
        %v1019 = vmul.f32 %v749, %v987
        %v1020 = vmul.f32 %v753, %v988
        %v1021 = vmul.f32 %v759, %v989
        %v1022 = vmul.f32 %v763, %v990
        %v1023 = vmul.f32 %v769, %v991
        %v1024 = vmul.f32 %v773, %v992
        %v1025 = vmul.f32 %v779, %v993
        %v1026 = vmul.f32 %v783, %v994
        %v1027 = vmul.f32 %v789, %v995
        %v1028 = vmul.f32 %v793, %v996
        %v1029 = vmul.f32 %v799, %v997
        %v1030 = vmul.f32 %v803, %v998
        %v1031 = vmul.f32 %v809, %v999
        %v1032 = vmul.f32 %v813, %v1000
        %v1033 = vmul.f32 %v819, %v1001
        %v1034 = vmul.f32 %v823, %v1002
        %v1035 = vmul.f32 %v829, %v1003
        %v1036 = vmul.f32 %v833, %v1004
        %v1037 = vmul.f32 %v839, %v1005
        %v1038 = vmul.f32 %v843, %v1006
        %v1039 = vadd.f32 %v1007, %v1008
        %v1040 = vadd.f32 %v1039, %v1009
        %v1041 = vadd.f32 %v1040, %v1010
        %v1042 = vadd.f32 %v1041, %v1011
        %v1043 = vadd.f32 %v1042, %v1012
        %v1044 = vadd.f32 %v1043, %v1013
        %v1045 = vadd.f32 %v1044, %v1014
        %v1046 = vadd.f32 %v1045, %v1015
        %v1047 = vadd.f32 %v1046, %v1016
        %v1048 = vadd.f32 %v1047, %v1017
        %v1049 = vadd.f32 %v1048, %v1018
        %v1050 = vadd.f32 %v1049, %v1019
        %v1051 = vadd.f32 %v1050, %v1020
        %v1052 = vadd.f32 %v1051, %v1021
        %v1053 = vadd.f32 %v1052, %v1022
        %v1054 = vadd.f32 %v1053, %v1023
        %v1055 = vadd.f32 %v1054, %v1024
        %v1056 = vadd.f32 %v1055, %v1025
        %v1057 = vadd.f32 %v1056, %v1026
        %v1058 = vadd.f32 %v1057, %v1027
        %v1059 = vadd.f32 %v1058, %v1028
        %v1060 = vadd.f32 %v1059, %v1029
        %v1061 = vadd.f32 %v1060, %v1030
        %v1062 = vadd.f32 %v1061, %v1031
        %v1063 = vadd.f32 %v1062, %v1032
        %v1064 = vadd.f32 %v1063, %v1033
        %v1065 = vadd.f32 %v1064, %v1034
        %v1066 = vadd.f32 %v1065, %v1035
        %v1067 = vadd.f32 %v1066, %v1036
        %v1068 = vadd.f32 %v1067, %v1037
        %v1069 = vadd.f32 %v1068, %v1038
        %v1070 = vrot.slane %v1069, 4
        %v1071 = vadd.f32 %v1069, %v1070
        %v1072 = vrot.slane %v1071, 2
        %v1073 = vadd.f32 %v1071, %v1072
        %v1074 = vrot.slane %v1073, 1
        %v1075 = vadd.f32 %v1073, %v1074
        %v1076 = vrcp.pop 256.0
        %v1077 = vmul.f32 %v1075, %v1076
        %v1078 = vld [vmem:[%s3] sm:$0x3]
        %v1079 = vmul.f32 %v1078, %v1077
        %vm1080 = vcmask 1041408
        %v1081 = vsel %vm1080, %v1079, 0.0
        %1082 = vadd.xlane.f32.xlu0 %v1081
        %v1083 = vpop.xlane.xlu0 %1082
        %v1084 = vmax.f32 %v1083, 0.0
        %v1085 = vld [vmem:[%s4] sm:$0x3]
        %v1086 = vmul.f32 %v1084, %v1085
        %v1087 = vsel %vm1080, %v1086, 0.0
        %v1088 = vrot.slane %v1087, 4
        %v1089 = vadd.f32 %v1087, %v1088
        %v1090 = vrot.slane %v1089, 2
        %v1091 = vadd.f32 %v1089, %v1090
        %v1092 = vrot.slane %v1091, 1
        %v1093 = vadd.f32 %v1091, %v1092
        %v1094 = vsub.f32 0.0, %v1093
        %v1095 = vmul.f32 %v1094, 1.442695
        %v1096 = vpow.pop %v1095
        %v1097 = vadd.f32 %v1096, 1.0
        %v1098 = vrcp.pop %v1097
        %v1099 = vmul.f32 1.0, %v1098
        %v1100 = vmul.f32 %v1007, %v1099
        %v1101 = vmul.f32 %v1008, %v1099
        %v1102 = vmul.f32 %v1009, %v1099
        %v1103 = vmul.f32 %v1010, %v1099
        %v1104 = vmul.f32 %v1011, %v1099
        %v1105 = vmul.f32 %v1012, %v1099
        %v1106 = vmul.f32 %v1013, %v1099
        %v1107 = vmul.f32 %v1014, %v1099
        %v1108 = vmul.f32 %v1015, %v1099
        %v1109 = vmul.f32 %v1016, %v1099
        %v1110 = vmul.f32 %v1017, %v1099
        %v1111 = vmul.f32 %v1018, %v1099
        %v1112 = vmul.f32 %v1019, %v1099
        %v1113 = vmul.f32 %v1020, %v1099
        %v1114 = vmul.f32 %v1021, %v1099
        %v1115 = vmul.f32 %v1022, %v1099
        %v1116 = vmul.f32 %v1023, %v1099
        %v1117 = vmul.f32 %v1024, %v1099
        %v1118 = vmul.f32 %v1025, %v1099
        %v1119 = vmul.f32 %v1026, %v1099
        %v1120 = vmul.f32 %v1027, %v1099
        %v1121 = vmul.f32 %v1028, %v1099
        %v1122 = vmul.f32 %v1029, %v1099
        %v1123 = vmul.f32 %v1030, %v1099
        %v1124 = vmul.f32 %v1031, %v1099
        %v1125 = vmul.f32 %v1032, %v1099
        %v1126 = vmul.f32 %v1033, %v1099
        %v1127 = vmul.f32 %v1034, %v1099
        %v1128 = vmul.f32 %v1035, %v1099
        %v1129 = vmul.f32 %v1036, %v1099
        %v1130 = vmul.f32 %v1037, %v1099
        %v1131 = vmul.f32 %v1038, %v1099
        %v1132 = vadd.f32 %v1100, %v691
        %v1133 = vadd.f32 %v1101, %v695
        %v1134 = vadd.f32 %v1102, %v701
        %v1135 = vadd.f32 %v1103, %v705
        %v1136 = vadd.f32 %v1104, %v711
        %v1137 = vadd.f32 %v1105, %v715
        %v1138 = vadd.f32 %v1106, %v721
        %v1139 = vadd.f32 %v1107, %v725
        %v1140 = vadd.f32 %v1108, %v731
        %v1141 = vadd.f32 %v1109, %v735
        %v1142 = vadd.f32 %v1110, %v741
        %v1143 = vadd.f32 %v1111, %v745
        %v1144 = vadd.f32 %v1112, %v751
        %v1145 = vadd.f32 %v1113, %v755
        %v1146 = vadd.f32 %v1114, %v761
        %v1147 = vadd.f32 %v1115, %v765
        %v1148 = vadd.f32 %v1116, %v771
        %v1149 = vadd.f32 %v1117, %v775
        %v1150 = vadd.f32 %v1118, %v781
        %v1151 = vadd.f32 %v1119, %v785
        %v1152 = vadd.f32 %v1120, %v791
        %v1153 = vadd.f32 %v1121, %v795
        %v1154 = vadd.f32 %v1122, %v801
        %v1155 = vadd.f32 %v1123, %v805
        %v1156 = vadd.f32 %v1124, %v811
        %v1157 = vadd.f32 %v1125, %v815
        %v1158 = vadd.f32 %v1126, %v821
        %v1159 = vadd.f32 %v1127, %v825
        %v1160 = vadd.f32 %v1128, %v831
        %v1161 = vadd.f32 %v1129, %v835
        %v1162 = vadd.f32 %v1130, %v841
        %v1163 = vadd.f32 %v1131, %v845
        %v1164 = vsub.f32 0.0, %v1132
        %v1165 = vsub.f32 0.0, %v1133
        %v1166 = vsub.f32 0.0, %v1134
        %v1167 = vsub.f32 0.0, %v1135
        %v1168 = vsub.f32 0.0, %v1136
        %v1169 = vsub.f32 0.0, %v1137
        %v1170 = vsub.f32 0.0, %v1138
        %v1171 = vsub.f32 0.0, %v1139
        %v1172 = vsub.f32 0.0, %v1140
        %v1173 = vsub.f32 0.0, %v1141
        %v1174 = vsub.f32 0.0, %v1142
        %v1175 = vsub.f32 0.0, %v1143
        %v1176 = vsub.f32 0.0, %v1144
        %v1177 = vsub.f32 0.0, %v1145
        %v1178 = vsub.f32 0.0, %v1146
        %v1179 = vsub.f32 0.0, %v1147
        %v1180 = vsub.f32 0.0, %v1148
        %v1181 = vsub.f32 0.0, %v1149
        %v1182 = vsub.f32 0.0, %v1150
        %v1183 = vsub.f32 0.0, %v1151
        %v1184 = vsub.f32 0.0, %v1152
        %v1185 = vsub.f32 0.0, %v1153
        %v1186 = vsub.f32 0.0, %v1154
        %v1187 = vsub.f32 0.0, %v1155
        %v1188 = vsub.f32 0.0, %v1156
        %v1189 = vsub.f32 0.0, %v1157
        %v1190 = vsub.f32 0.0, %v1158
        %v1191 = vsub.f32 0.0, %v1159
        %v1192 = vsub.f32 0.0, %v1160
        %v1193 = vsub.f32 0.0, %v1161
        %v1194 = vsub.f32 0.0, %v1162
        %v1195 = vsub.f32 0.0, %v1163
        %v1196 = vmul.f32 %v1164, 1.442695
        %v1197 = vpow.pop %v1196
        %v1198 = vmul.f32 %v1165, 1.442695
        %v1199 = vpow.pop %v1198
        %v1200 = vmul.f32 %v1166, 1.442695
        %v1201 = vpow.pop %v1200
        %v1202 = vmul.f32 %v1167, 1.442695
        %v1203 = vpow.pop %v1202
        %v1204 = vmul.f32 %v1168, 1.442695
        %v1205 = vpow.pop %v1204
        %v1206 = vmul.f32 %v1169, 1.442695
        %v1207 = vpow.pop %v1206
        %v1208 = vmul.f32 %v1170, 1.442695
        %v1209 = vpow.pop %v1208
        %v1210 = vmul.f32 %v1171, 1.442695
        %v1211 = vpow.pop %v1210
        %v1212 = vmul.f32 %v1172, 1.442695
        %v1213 = vpow.pop %v1212
        %v1214 = vmul.f32 %v1173, 1.442695
        %v1215 = vpow.pop %v1214
        %v1216 = vmul.f32 %v1174, 1.442695
        %v1217 = vpow.pop %v1216
        %v1218 = vmul.f32 %v1175, 1.442695
        %v1219 = vpow.pop %v1218
        %v1220 = vmul.f32 %v1176, 1.442695
        %v1221 = vpow.pop %v1220
        %v1222 = vmul.f32 %v1177, 1.442695
        %v1223 = vpow.pop %v1222
        %v1224 = vmul.f32 %v1178, 1.442695
        %v1225 = vpow.pop %v1224
        %v1226 = vmul.f32 %v1179, 1.442695
        %v1227 = vpow.pop %v1226
        %v1228 = vmul.f32 %v1180, 1.442695
        %v1229 = vpow.pop %v1228
        %v1230 = vmul.f32 %v1181, 1.442695
        %v1231 = vpow.pop %v1230
        %v1232 = vmul.f32 %v1182, 1.442695
        %v1233 = vpow.pop %v1232
        %v1234 = vmul.f32 %v1183, 1.442695
        %v1235 = vpow.pop %v1234
        %v1236 = vmul.f32 %v1184, 1.442695
        %v1237 = vpow.pop %v1236
        %v1238 = vmul.f32 %v1185, 1.442695
        %v1239 = vpow.pop %v1238
        %v1240 = vmul.f32 %v1186, 1.442695
        %v1241 = vpow.pop %v1240
        %v1242 = vmul.f32 %v1187, 1.442695
        %v1243 = vpow.pop %v1242
        %v1244 = vmul.f32 %v1188, 1.442695
        %v1245 = vpow.pop %v1244
        %v1246 = vmul.f32 %v1189, 1.442695
        %v1247 = vpow.pop %v1246
        %v1248 = vmul.f32 %v1190, 1.442695
        %v1249 = vpow.pop %v1248
        %v1250 = vmul.f32 %v1191, 1.442695
        %v1251 = vpow.pop %v1250
        %v1252 = vmul.f32 %v1192, 1.442695
        %v1253 = vpow.pop %v1252
        %v1254 = vmul.f32 %v1193, 1.442695
        %v1255 = vpow.pop %v1254
        %v1256 = vmul.f32 %v1194, 1.442695
        %v1257 = vpow.pop %v1256
        %v1258 = vmul.f32 %v1195, 1.442695
        %v1259 = vpow.pop %v1258
        %v1260 = vadd.f32 %v1197, 1.0
        %v1261 = vadd.f32 %v1199, 1.0
        %v1262 = vadd.f32 %v1201, 1.0
        %v1263 = vadd.f32 %v1203, 1.0
        %v1264 = vadd.f32 %v1205, 1.0
        %v1265 = vadd.f32 %v1207, 1.0
        %v1266 = vadd.f32 %v1209, 1.0
        %v1267 = vadd.f32 %v1211, 1.0
        %v1268 = vadd.f32 %v1213, 1.0
        %v1269 = vadd.f32 %v1215, 1.0
        %v1270 = vadd.f32 %v1217, 1.0
        %v1271 = vadd.f32 %v1219, 1.0
        %v1272 = vadd.f32 %v1221, 1.0
        %v1273 = vadd.f32 %v1223, 1.0
        %v1274 = vadd.f32 %v1225, 1.0
        %v1275 = vadd.f32 %v1227, 1.0
        %v1276 = vadd.f32 %v1229, 1.0
        %v1277 = vadd.f32 %v1231, 1.0
        %v1278 = vadd.f32 %v1233, 1.0
        %v1279 = vadd.f32 %v1235, 1.0
        %v1280 = vadd.f32 %v1237, 1.0
        %v1281 = vadd.f32 %v1239, 1.0
        %v1282 = vadd.f32 %v1241, 1.0
        %v1283 = vadd.f32 %v1243, 1.0
        %v1284 = vadd.f32 %v1245, 1.0
        %v1285 = vadd.f32 %v1247, 1.0
        %v1286 = vadd.f32 %v1249, 1.0
        %v1287 = vadd.f32 %v1251, 1.0
        %v1288 = vadd.f32 %v1253, 1.0
        %v1289 = vadd.f32 %v1255, 1.0
        %v1290 = vadd.f32 %v1257, 1.0
        %v1291 = vadd.f32 %v1259, 1.0
        %v1292 = vrcp.pop %v1260
        %v1293 = vrcp.pop %v1261
        %v1294 = vrcp.pop %v1262
        %v1295 = vrcp.pop %v1263
        %v1296 = vrcp.pop %v1264
        %v1297 = vrcp.pop %v1265
        %v1298 = vrcp.pop %v1266
        %v1299 = vrcp.pop %v1267
        %v1300 = vrcp.pop %v1268
        %v1301 = vrcp.pop %v1269
        %v1302 = vrcp.pop %v1270
        %v1303 = vrcp.pop %v1271
        %v1304 = vrcp.pop %v1272
        %v1305 = vrcp.pop %v1273
        %v1306 = vrcp.pop %v1274
        %v1307 = vrcp.pop %v1275
        %v1308 = vrcp.pop %v1276
        %v1309 = vrcp.pop %v1277
        %v1310 = vrcp.pop %v1278
        %v1311 = vrcp.pop %v1279
        %v1312 = vrcp.pop %v1280
        %v1313 = vrcp.pop %v1281
        %v1314 = vrcp.pop %v1282
        %v1315 = vrcp.pop %v1283
        %v1316 = vrcp.pop %v1284
        %v1317 = vrcp.pop %v1285
        %v1318 = vrcp.pop %v1286
        %v1319 = vrcp.pop %v1287
        %v1320 = vrcp.pop %v1288
        %v1321 = vrcp.pop %v1289
        %v1322 = vrcp.pop %v1290
        %v1323 = vrcp.pop %v1291
        %v1324 = vmul.f32 %v1132, %v1292
        %v1325 = vmul.f32 %v1133, %v1293
        %v1326 = vmul.f32 %v1134, %v1294
        %v1327 = vmul.f32 %v1135, %v1295
        %v1328 = vmul.f32 %v1136, %v1296
        %v1329 = vmul.f32 %v1137, %v1297
        %v1330 = vmul.f32 %v1138, %v1298
        %v1331 = vmul.f32 %v1139, %v1299
        %v1332 = vmul.f32 %v1140, %v1300
        %v1333 = vmul.f32 %v1141, %v1301
        %v1334 = vmul.f32 %v1142, %v1302
        %v1335 = vmul.f32 %v1143, %v1303
        %v1336 = vmul.f32 %v1144, %v1304
        %v1337 = vmul.f32 %v1145, %v1305
        %v1338 = vmul.f32 %v1146, %v1306
        %v1339 = vmul.f32 %v1147, %v1307
        %v1340 = vmul.f32 %v1148, %v1308
        %v1341 = vmul.f32 %v1149, %v1309
        %v1342 = vmul.f32 %v1150, %v1310
        %v1343 = vmul.f32 %v1151, %v1311
        %v1344 = vmul.f32 %v1152, %v1312
        %v1345 = vmul.f32 %v1153, %v1313
        %v1346 = vmul.f32 %v1154, %v1314
        %v1347 = vmul.f32 %v1155, %v1315
        %v1348 = vmul.f32 %v1156, %v1316
        %v1349 = vmul.f32 %v1157, %v1317
        %v1350 = vmul.f32 %v1158, %v1318
        %v1351 = vmul.f32 %v1159, %v1319
        %v1352 = vmul.f32 %v1160, %v1320
        %v1353 = vmul.f32 %v1161, %v1321
        %v1354 = vmul.f32 %v1162, %v1322
        %v1355 = vmul.f32 %v1163, %v1323
        %1356 = vst [vmem:[%s257] sm:$0xff] %v1324
        %1357 = vst [vmem:[%s257 + $0x8] sm:$0xff] %v1325
        %1358 = vst [vmem:[%s257 + $0x10] sm:$0xff] %v1326
        %1359 = vst [vmem:[%s257 + $0x18] sm:$0xff] %v1327
        %1360 = vst [vmem:[%s257 + $0x20] sm:$0xff] %v1328
        %1361 = vst [vmem:[%s257 + $0x28] sm:$0xff] %v1329
        %1362 = vst [vmem:[%s257 + $0x30] sm:$0xff] %v1330
        %1363 = vst [vmem:[%s257 + $0x38] sm:$0xff] %v1331
        %1364 = vst [vmem:[%s257 + $0x40] sm:$0xff] %v1332
        %1365 = vst [vmem:[%s257 + $0x48] sm:$0xff] %v1333
        %1366 = vst [vmem:[%s257 + $0x50] sm:$0xff] %v1334
        %1367 = vst [vmem:[%s257 + $0x58] sm:$0xff] %v1335
        %1368 = vst [vmem:[%s257 + $0x60] sm:$0xff] %v1336
        %1369 = vst [vmem:[%s257 + $0x68] sm:$0xff] %v1337
        %1370 = vst [vmem:[%s257 + $0x70] sm:$0xff] %v1338
        %1371 = vst [vmem:[%s257 + $0x78] sm:$0xff] %v1339
        %1372 = vst [vmem:[%s257 + $0x80] sm:$0xff] %v1340
        %1373 = vst [vmem:[%s257 + $0x88] sm:$0xff] %v1341
        %1374 = vst [vmem:[%s257 + $0x90] sm:$0xff] %v1342
        %1375 = vst [vmem:[%s257 + $0x98] sm:$0xff] %v1343
        %1376 = vst [vmem:[%s257 + $0xa0] sm:$0xff] %v1344
        %1377 = vst [vmem:[%s257 + $0xa8] sm:$0xff] %v1345
        %1378 = vst [vmem:[%s257 + $0xb0] sm:$0xff] %v1346
        %1379 = vst [vmem:[%s257 + $0xb8] sm:$0xff] %v1347
        %1380 = vst [vmem:[%s257 + $0xc0] sm:$0xff] %v1348
        %1381 = vst [vmem:[%s257 + $0xc8] sm:$0xff] %v1349
        %1382 = vst [vmem:[%s257 + $0xd0] sm:$0xff] %v1350
        %1383 = vst [vmem:[%s257 + $0xd8] sm:$0xff] %v1351
        %1384 = vst [vmem:[%s257 + $0xe0] sm:$0xff] %v1352
        %1385 = vst [vmem:[%s257 + $0xe8] sm:$0xff] %v1353
        %1386 = vst [vmem:[%s257 + $0xf0] sm:$0xff] %v1354
        %1387 = vst [vmem:[%s257 + $0xf8] sm:$0xff] %v1355
        %s1388 = sand.u32 %s141, 1
        %s1389 = scalar_lea.sflag [#allocation4], %s1388
        %s1390 = sand.u32 %s141, 1
        %s1391 = smul.addr %s1390, 256
        %s1392 = scalar_lea.vmem [#allocation7], %s1391
        // Predicated region
        $region49: #{tpu_custom_call.1} parent=39 // pred_check
          %p1393 = pneg %p151
        $region50: #{tpu_custom_call.1} parent=39 // pred_check_branch
          %1395 = sbr.rel (%p1393) target = $region52
        $region51: #{tpu_custom_call.1} parent=39 // pred_region
          %s1397 = ssub.s32 4096, 4096
          %1398 = vsyncadd %s1389, %s1397
          %s1399 = smul.addr %s23, 32
          %s1400 = smul.addr %s1399, 128
          %s1401 = scalar_lea.hbm %s5, %s1400
          %s1402 = sshll.u32 %s1392, 4
          %s1403 = int_to_ptr.vmem [resolvable:$true] %s1402
          %1408 = dma.vmem_to_hbm [thread:$0]  %s1403, 4096, %s1401, %s1389, 128, 128, 8
        $region52: #{tpu_custom_call.1} parent=39 // pred_fallthru
          _
      $region40: #{tpu_custom_call.1} parent=5 // pred_fallthru
        _
      %p1409 = scmp.le.s32.totalorder 2, %s18
      // Predicated region
      $region53: #{tpu_custom_call.1} parent=5 // pred_check
        %p1410 = pneg %p1409
      $region54: #{tpu_custom_call.1} parent=5 // pred_check_branch
        %1412 = sbr.rel (%p1410) target = $region56
      $region55: #{tpu_custom_call.1} parent=5 // pred_region
        %s1413 = ssub.s32 %s18, 2
        // Predicated region
        $region57: #{tpu_custom_call.1} parent=55 // pred_check
          %p1414 = pneg %p157
        $region58: #{tpu_custom_call.1} parent=55 // pred_check_branch
          %1416 = sbr.rel (%p1414) target = $region60
        $region59: #{tpu_custom_call.1} parent=55 // pred_region
          %s1417 = sand.u32 %s142, 1
          %s1418 = scalar_lea.sflag [#allocation4], %s1417
          %s1419 = sand.u32 %s142, 1
          %s1420 = smul.addr %s1419, 256
          %s1421 = scalar_lea.vmem [#allocation7], %s1420
          %1422 = dma.done %s1418, 4096
        $region60: #{tpu_custom_call.1} parent=55 // pred_fallthru
          _
      $region56: #{tpu_custom_call.1} parent=5 // pred_fallthru
        _
    $region6: #{tpu_custom_call.1} parent=1 // loop_footer
      %s22 = sadd.s32 1, %s18
    $region7: #{tpu_custom_call.1} parent=1 // loop_footer_branch
      %17 = sbr.rel target = $region3
    $region8: #{tpu_custom_call.1} parent=1 // loop_exit
      _
    %1423 = vsyncpa [#allocation3], 1
    %s1424 = scalar_lea.sflag [#allocation3], 1
    %1425 = vsyncpa %s1424, 1
    %1426 = vsyncpa [#allocation6], 1
    %1427 = vsyncpa [#allocation4], 1
    %s1428 = scalar_lea.sflag [#allocation4], 1
    %1429 = vsyncpa %s1428, 1

</llo_original>
